<compile_context>
chip_gen: v6e
topology: v6e:2x2x1
jax: 0.10.0
libtpu: 0.0.40
codegen_flags: <defaults>
</compile_context>

<pallas_src>
import jax
import jax.numpy as jnp
from jax.experimental import pallas as pl
from jax.experimental.pallas import tpu as pltpu

BATCH_SIZE = 1
NUM_LAYER = 2
SEQ = 1

EMBEDDING_DIM = 32
HIDDEN_DIM = 32
TAGSET_SIZE = 8

ROW_TILE = 8  # sublane-aligned row tile for the batched path


def _lstm_tagger_kernel(x_ref, w_ref, b_ref, out_ref):
    """Forward pass for one tile of independent SEQ=1 rows.

    x_ref : (R, E)          input rows (R independent sentences, SEQ==1 each)
    w_ref : (3, H, 4H)      slab 0/1 = W_ih_l{0,1}^T (i/f/o cols pre-scaled 0.5),
                            slab 2   = W_tag^T zero-padded to (H, 4H)
    b_ref : (3, 4H)         row 0/1 = (b_ih + b_hh) * gate-scale, row 2 = b_tag pad
    out_ref: (R, 4H)        lane-dense store; lanes >= TAGSET_SIZE are garbage,
                            sliced away in the wrapper.
    """
    H = HIDDEN_DIM
    T = TAGSET_SIZE

    x = x_ref[...]                                            # (R, E)

    def cell(x_row, w, b):
        # h_prev = c_prev = 0 (init_hidden, SEQ==1): W_hh terms vanish, and the
        # forget-gate path f * c_prev is identically zero, so it is dropped.
        gates = jnp.dot(x_row, w, preferred_element_type=jnp.float32) + b
        t = jnp.tanh(gates)                                   # one EUP pass, 128 lanes
        i = 0.5 * (1.0 + t[:, 0 * H:1 * H])                   # == sigmoid (pre-scaled)
        g = t[:, 2 * H:3 * H]                                 # unscaled column -> tanh
        o = 0.5 * (1.0 + t[:, 3 * H:4 * H])                   # == sigmoid (pre-scaled)
        c_new = i * g
        return o * jnp.tanh(c_new)

    h0 = cell(x, w_ref[0], b_ref[0:1, :])                     # layer 0
    h1 = cell(h0, w_ref[1], b_ref[1:2, :])                    # layer 1

    # hidden2tag: (R, H) @ (H, 4H) zero-padded slab; only first T lanes valid.
    tag_full = (jnp.dot(h1, w_ref[2], preferred_element_type=jnp.float32)
                + b_ref[2:3, :])                              # (R, 4H)
    tag = tag_full[:, :T]

    # log_softmax over the T valid lanes (max-subtracted).
    m = jnp.max(tag, axis=-1, keepdims=True)
    lse = jnp.log(jnp.sum(jnp.exp(tag - m), axis=-1, keepdims=True)) + m
    out_ref[...] = tag_full - lse                             # unmasked 128-lane store


def prepare_params(params):
    """One-time parameter packing (off the per-call critical path).

    Returns:
      w_slab: (3, H, 4H) float32
      b_slab: (3, 4H)    float32
    """
    E = params["w_ih_l0"].shape[1]
    H = params["w_hh_l0"].shape[1]
    T = params["w_tag"].shape[0]
    assert E == H, "slab packing assumes embedding_dim == hidden_dim"
    G = 4 * H

    # sigmoid(z) = 0.5 * (1 + tanh(z/2)): pre-scale the i/f/o gate columns by
    # 0.5 so the kernel needs only one tanh over the full 128-lane gates vreg.
    scale = (jnp.ones((G,), jnp.float32)
             .at[0:2 * H].set(0.5)        # i, f columns
             .at[3 * H:4 * H].set(0.5))   # o columns

    w0 = params["w_ih_l0"].T * scale[None, :]
    w1 = params["w_ih_l1"].T * scale[None, :]
    wtag = jnp.zeros((H, G), jnp.float32).at[:, :T].set(params["w_tag"].T)
    w_slab = jnp.stack([w0, w1, wtag], axis=0).astype(jnp.float32)

    b0 = (params["b_ih_l0"] + params["b_hh_l0"]) * scale
    b1 = (params["b_ih_l1"] + params["b_hh_l1"]) * scale
    btag = jnp.zeros((G,), jnp.float32).at[:T].set(params["b_tag"])
    b_slab = jnp.stack([b0, b1, btag], axis=0).astype(jnp.float32)
    return w_slab, b_slab


@jax.jit
def lstm_tagger_forward(sentence, w_slab, b_slab):
    """Single-sentence path (SEQ=1, BATCH_SIZE=1), minimum fixed overhead."""
    x = sentence.reshape(SEQ, -1).astype(jnp.float32)
    vmem = pl.BlockSpec(memory_space=pltpu.MemorySpace.VMEM)
    full = pl.pallas_call(
        _lstm_tagger_kernel,
        out_shape=jax.ShapeDtypeStruct((SEQ, 4 * HIDDEN_DIM), jnp.float32),
        in_specs=[vmem, vmem, vmem],
        out_specs=vmem,
    )(x, w_slab, b_slab)
    return full[:, :TAGSET_SIZE]


@jax.jit
def lstm_tagger_forward_batched(sentences, w_slab, b_slab):
    """Batched path: B independent SEQ=1 sentences per call.

    Weights/biases stay resident (index_map -> block 0) so they are DMA'd once;
    the row axis is a 'parallel' grid axis (shards across v7x's two TCs).
    """
    B, E = sentences.shape
    Bp = ((B + ROW_TILE - 1) // ROW_TILE) * ROW_TILE
    x = jnp.zeros((Bp, E), jnp.float32).at[:B].set(sentences.astype(jnp.float32))
    G = 4 * HIDDEN_DIM

    full = pl.pallas_call(
        _lstm_tagger_kernel,
        out_shape=jax.ShapeDtypeStruct((Bp, G), jnp.float32),
        grid=(Bp // ROW_TILE,),
        in_specs=[
            pl.BlockSpec((ROW_TILE, E), lambda i: (i, 0)),
            pl.BlockSpec((3, HIDDEN_DIM, G), lambda i: (0, 0, 0)),
            pl.BlockSpec((3, G), lambda i: (0, 0)),
        ],
        out_specs=pl.BlockSpec((ROW_TILE, G), lambda i: (i, 0)),
        compiler_params=pltpu.CompilerParams(
            dimension_semantics=("parallel",)),
    )(x, w_slab, b_slab)
    return full[:B, :TAGSET_SIZE]


def reference_forward(sentence, params):
    """Pure-JAX reference matching torch.nn.LSTM + Linear + log_softmax."""
    x = sentence.reshape(SEQ, BATCH_SIZE, -1).astype(jnp.float32)
    H = params["w_hh_l0"].shape[1]
    h = [jnp.zeros((BATCH_SIZE, H), jnp.float32) for _ in range(NUM_LAYER)]
    c = [jnp.zeros((BATCH_SIZE, H), jnp.float32) for _ in range(NUM_LAYER)]
    outs = []
    for t in range(SEQ):
        inp = x[t]
        for l in range(NUM_LAYER):
            gates = (inp @ params[f"w_ih_l{l}"].T + params[f"b_ih_l{l}"]
                     + h[l] @ params[f"w_hh_l{l}"].T + params[f"b_hh_l{l}"])
            i, f, g, o = jnp.split(gates, 4, axis=-1)
            i, f, o = jax.nn.sigmoid(i), jax.nn.sigmoid(f), jax.nn.sigmoid(o)
            g = jnp.tanh(g)
            c[l] = f * c[l] + i * g
            h[l] = o * jnp.tanh(c[l])
            inp = h[l]
        outs.append(inp)
    lstm_out = jnp.stack(outs, axis=0)                       # (SEQ, B, H)
    tag_space = lstm_out.reshape(SEQ, -1) @ params["w_tag"].T + params["b_tag"]
    return jax.nn.log_softmax(tag_space, axis=1)


def init_params(key, embedding_dim, hidden_dim, tagset_size):
    """Deterministic PyTorch-style uniform(-1/sqrt(H), 1/sqrt(H)) init."""
    bound = 1.0 / jnp.sqrt(hidden_dim)
    keys = jax.random.split(key, 10)
    u = lambda k, shape: jax.random.uniform(
        k, shape, jnp.float32, minval=-bound, maxval=bound)
    return {
        "w_ih_l0": u(keys[0], (4 * hidden_dim, embedding_dim)),
        "w_hh_l0": u(keys[1], (4 * hidden_dim, hidden_dim)),
        "b_ih_l0": u(keys[2], (4 * hidden_dim,)),
        "b_hh_l0": u(keys[3], (4 * hidden_dim,)),
        "w_ih_l1": u(keys[4], (4 * hidden_dim, hidden_dim)),
        "w_hh_l1": u(keys[5], (4 * hidden_dim, hidden_dim)),
        "b_ih_l1": u(keys[6], (4 * hidden_dim,)),
        "b_hh_l1": u(keys[7], (4 * hidden_dim,)),
        "w_tag":   u(keys[8], (tagset_size, hidden_dim)),
        "b_tag":   u(keys[9], (tagset_size,)),
    }


if __name__ == "__main__":
    key = jax.random.PRNGKey(0)
    pkey, xkey, bkey = jax.random.split(key, 3)
    params = init_params(pkey, EMBEDDING_DIM, HIDDEN_DIM, TAGSET_SIZE)

    # One-time packing (transposes, bias sums, gate pre-scaling, slab stacking).
    w_slab, b_slab = jax.block_until_ready(prepare_params(params))

    # ---- single-sentence path (matches the module exactly: SEQ=1, B=1) ----
    sentence = jax.random.normal(xkey, (SEQ, EMBEDDING_DIM), jnp.float32)
    tag_scores = jax.block_until_ready(
        lstm_tagger_forward(sentence, w_slab, b_slab))
    ref = reference_forward(sentence, params)
    assert tag_scores.shape == (SEQ, TAGSET_SIZE)
    assert jnp.allclose(tag_scores, ref, rtol=1e-5, atol=1e-5), (
        f"single mismatch: {tag_scores} vs {ref}")

    # ---- batched path: 16 independent SEQ=1 sentences in one pallas_call ----
    B = 16
    sentences = jax.random.normal(bkey, (B, EMBEDDING_DIM), jnp.float32)
    batched = jax.block_until_ready(
        lstm_tagger_forward_batched(sentences, w_slab, b_slab))
    ref_b = jnp.concatenate(
        [reference_forward(sentences[b:b + 1], params) for b in range(B)], axis=0)
    assert batched.shape == (B, TAGSET_SIZE)
    assert jnp.allclose(batched, ref_b, rtol=1e-5, atol=1e-5), "batched mismatch"

    print("KERNEL_OK")
</pallas_src>

<mosaic_0001>
module attributes {stable_mosaic.version = 11 : i64} {
  func.func @_lstm_tagger_kernel(%arg0: memref<1x32xf32, #tpu.memory_space<vmem>>, %arg1: memref<3x32x128xf32, #tpu.memory_space<vmem>>, %arg2: memref<3x128xf32, #tpu.memory_space<vmem>>, %arg3: memref<1x128xf32, #tpu.memory_space<vmem>>) attributes {dimension_semantics = [], scalar_prefetch = 0 : i64, scratch_operands = 0 : i64, tpu.core_type = #tpu.core_type<tc>} {
    %c0 = arith.constant 0 : index
    %c0_0 = arith.constant 0 : index
    %0 = vector.load %arg0[%c0, %c0_0] : memref<1x32xf32, #tpu.memory_space<vmem>>, vector<1x32xf32>
    %c0_1 = arith.constant 0 : index
    %c0_2 = arith.constant 0 : index
    %c0_3 = arith.constant 0 : index
    %1 = vector.load %arg1[%c0_1, %c0_2, %c0_3] : memref<3x32x128xf32, #tpu.memory_space<vmem>>, vector<1x32x128xf32>
    %2 = vector.shape_cast %1 : vector<1x32x128xf32> to vector<32x128xf32>
    %c0_4 = arith.constant 0 : index
    %c0_5 = arith.constant 0 : index
    %3 = vector.load %arg2[%c0_4, %c0_5] : memref<3x128xf32, #tpu.memory_space<vmem>>, vector<1x128xf32>
    %cst = arith.constant dense<0.000000e+00> : vector<1x128xf32>
    %4 = tpu.matmul %0, %2, %cst {dimension_numbers = #tpu.dot_dimension_numbers<[1], [0], [0], [1], [0, 0, 1, 1], [], []>} : vector<1x32xf32>, vector<32x128xf32>, vector<1x128xf32> -> vector<1x128xf32>
    %5 = arith.addf %4, %3 : vector<1x128xf32>
    %6 = math.tanh %5 : vector<1x128xf32>
    %7 = vector.extract_strided_slice %6 {offsets = [0, 0], sizes = [1, 32], strides = [1, 1]} : vector<1x128xf32> to vector<1x32xf32>
    %cst_6 = arith.constant 1.000000e+00 : f32
    %8 = vector.broadcast %cst_6 : f32 to vector<1x32xf32>
    %9 = arith.addf %8, %7 : vector<1x32xf32>
    %cst_7 = arith.constant 5.000000e-01 : f32
    %10 = vector.broadcast %cst_7 : f32 to vector<1x32xf32>
    %11 = arith.mulf %10, %9 : vector<1x32xf32>
    %12 = vector.extract_strided_slice %6 {offsets = [0, 64], sizes = [1, 32], strides = [1, 1]} : vector<1x128xf32> to vector<1x32xf32>
    %13 = vector.extract_strided_slice %6 {offsets = [0, 96], sizes = [1, 32], strides = [1, 1]} : vector<1x128xf32> to vector<1x32xf32>
    %cst_8 = arith.constant 1.000000e+00 : f32
    %14 = vector.broadcast %cst_8 : f32 to vector<1x32xf32>
    %15 = arith.addf %14, %13 : vector<1x32xf32>
    %cst_9 = arith.constant 5.000000e-01 : f32
    %16 = vector.broadcast %cst_9 : f32 to vector<1x32xf32>
    %17 = arith.mulf %16, %15 : vector<1x32xf32>
    %18 = arith.mulf %11, %12 : vector<1x32xf32>
    %19 = math.tanh %18 : vector<1x32xf32>
    %20 = arith.mulf %17, %19 : vector<1x32xf32>
    %c1 = arith.constant 1 : index
    %c0_10 = arith.constant 0 : index
    %c0_11 = arith.constant 0 : index
    %21 = vector.load %arg1[%c1, %c0_10, %c0_11] : memref<3x32x128xf32, #tpu.memory_space<vmem>>, vector<1x32x128xf32>
    %22 = vector.shape_cast %21 : vector<1x32x128xf32> to vector<32x128xf32>
    %c1_12 = arith.constant 1 : index
    %c0_13 = arith.constant 0 : index
    %23 = vector.load %arg2[%c1_12, %c0_13] : memref<3x128xf32, #tpu.memory_space<vmem>>, vector<1x128xf32>
    %cst_14 = arith.constant dense<0.000000e+00> : vector<1x128xf32>
    %24 = tpu.matmul %20, %22, %cst_14 {dimension_numbers = #tpu.dot_dimension_numbers<[1], [0], [0], [1], [0, 0, 1, 1], [], []>} : vector<1x32xf32>, vector<32x128xf32>, vector<1x128xf32> -> vector<1x128xf32>
    %25 = arith.addf %24, %23 : vector<1x128xf32>
    %26 = math.tanh %25 : vector<1x128xf32>
    %27 = vector.extract_strided_slice %26 {offsets = [0, 0], sizes = [1, 32], strides = [1, 1]} : vector<1x128xf32> to vector<1x32xf32>
    %cst_15 = arith.constant 1.000000e+00 : f32
    %28 = vector.broadcast %cst_15 : f32 to vector<1x32xf32>
    %29 = arith.addf %28, %27 : vector<1x32xf32>
    %cst_16 = arith.constant 5.000000e-01 : f32
    %30 = vector.broadcast %cst_16 : f32 to vector<1x32xf32>
    %31 = arith.mulf %30, %29 : vector<1x32xf32>
    %32 = vector.extract_strided_slice %26 {offsets = [0, 64], sizes = [1, 32], strides = [1, 1]} : vector<1x128xf32> to vector<1x32xf32>
    %33 = vector.extract_strided_slice %26 {offsets = [0, 96], sizes = [1, 32], strides = [1, 1]} : vector<1x128xf32> to vector<1x32xf32>
    %cst_17 = arith.constant 1.000000e+00 : f32
    %34 = vector.broadcast %cst_17 : f32 to vector<1x32xf32>
    %35 = arith.addf %34, %33 : vector<1x32xf32>
    %cst_18 = arith.constant 5.000000e-01 : f32
    %36 = vector.broadcast %cst_18 : f32 to vector<1x32xf32>
    %37 = arith.mulf %36, %35 : vector<1x32xf32>
    %38 = arith.mulf %31, %32 : vector<1x32xf32>
    %39 = math.tanh %38 : vector<1x32xf32>
    %40 = arith.mulf %37, %39 : vector<1x32xf32>
    %c2 = arith.constant 2 : index
    %c0_19 = arith.constant 0 : index
    %c0_20 = arith.constant 0 : index
    %41 = vector.load %arg1[%c2, %c0_19, %c0_20] : memref<3x32x128xf32, #tpu.memory_space<vmem>>, vector<1x32x128xf32>
    %42 = vector.shape_cast %41 : vector<1x32x128xf32> to vector<32x128xf32>
    %cst_21 = arith.constant dense<0.000000e+00> : vector<1x128xf32>
    %43 = tpu.matmul %40, %42, %cst_21 {dimension_numbers = #tpu.dot_dimension_numbers<[1], [0], [0], [1], [0, 0, 1, 1], [], []>} : vector<1x32xf32>, vector<32x128xf32>, vector<1x128xf32> -> vector<1x128xf32>
    %c2_22 = arith.constant 2 : index
    %c0_23 = arith.constant 0 : index
    %44 = vector.load %arg2[%c2_22, %c0_23] : memref<3x128xf32, #tpu.memory_space<vmem>>, vector<1x128xf32>
    %45 = arith.addf %43, %44 : vector<1x128xf32>
    %46 = vector.extract_strided_slice %45 {offsets = [0, 0], sizes = [1, 8], strides = [1, 1]} : vector<1x128xf32> to vector<1x8xf32>
    %cst_24 = arith.constant dense<0xFF800000> : vector<1xf32>
    %47 = vector.multi_reduction <maximumf>, %46, %cst_24 [1] : vector<1x8xf32> to vector<1xf32>
    %48 = vector.shape_cast %47 : vector<1xf32> to vector<1x1xf32>
    %49 = vector.broadcast %48 : vector<1x1xf32> to vector<1x8xf32>
    %50 = arith.subf %46, %49 : vector<1x8xf32>
    %51 = math.exp %50 : vector<1x8xf32>
    %cst_25 = arith.constant dense<0.000000e+00> : vector<1xf32>
    %52 = vector.multi_reduction <add>, %51, %cst_25 [1] : vector<1x8xf32> to vector<1xf32>
    %53 = vector.shape_cast %52 : vector<1xf32> to vector<1x1xf32>
    %54 = math.log %53 : vector<1x1xf32>
    %55 = arith.addf %54, %48 : vector<1x1xf32>
    %56 = vector.broadcast %55 : vector<1x1xf32> to vector<1x128xf32>
    %57 = arith.subf %45, %56 : vector<1x128xf32>
    %c0_26 = arith.constant 0 : index
    %c0_27 = arith.constant 0 : index
    %58 = vector.load %arg3[%c0_26, %c0_27] : memref<1x128xf32, #tpu.memory_space<vmem>>, vector<1x128xf32>
    tpu.vector_store %arg3[%c0_26, %c0_27], %57 {strides = array<i32>} : memref<1x128xf32, #tpu.memory_space<vmem>>, vector<1x128xf32>,
    return
  }
}

</mosaic_0001>

<llo_original>
// kernel: lstm_tagger_forward.1
$region0: #{lstm_tagger_forward.1}
  #allocation0 [shape = 'u32[]', space=smem, size = 0x4, offset = 0x4, fixed_abs, tag = 'smem constant byte address 0x4 - core index']
  #allocation1 [shape = 'u32[144,128]{1,0:T(1,128)}', space=vmem, size = 0x12000, scoped, tag = 'internal scratch']
  %s0 = inlined_call_operand.hbm [shape: f32[1,32], index: 0, kind: input, shape index: {}]
  %s1 = inlined_call_operand.hbm [shape: f32[3,32,128], index: 1, kind: input, shape index: {}]
  %s2 = inlined_call_operand.hbm [shape: f32[3,128], index: 2, kind: input, shape index: {}]
  %s3 = inlined_call_operand.hbm [shape: f32[1,128], index: 3, kind: output, shape index: {}]
  %s4 = sld [smem:[#allocation0]]
  $region34: #{lstm_tagger_forward.1} parent=0
    _
  %s6 = ssub.s32 1, %s4
  %s7 = scalar_select 0, %s6, %s4
  $region1: #{lstm_tagger_forward.1} parent=0
    #allocation2 [shape = 'u8[512]{0}', space=vmem, size = 0x400, scoped, tag = 'input window, operand 0, single buffered']
    #allocation3 [shape = 's32[1]{0}', space=sflag, size = 0x4, scoped, tag = 'scoped memory for lstm_tagger_forward.1']
    #allocation4 [shape = 's32[1]{0}', space=sflag, size = 0x4, scoped, tag = 'scoped memory for lstm_tagger_forward.1']
    #allocation5 [shape = 'u8[49152]{0}', space=vmem, size = 0xc000, scoped, tag = 'input window, operand 1, single buffered']
    #allocation6 [shape = 's32[1]{0}', space=sflag, size = 0x4, scoped, tag = 'scoped memory for lstm_tagger_forward.1']
    #allocation7 [shape = 'u8[2048]{0}', space=vmem, size = 0x800, scoped, tag = 'input window, operand 2, single buffered']
    #allocation8 [shape = 'u8[512]{0}', space=vmem, size = 0x400, scoped, tag = 'output window, operand 0, single buffered']
    %8 = vsyncpa [#allocation3], 0
    %9 = vsyncpa [#allocation6], 0
    %10 = vsyncpa [#allocation4], 0
    // Predicated region
    $region2: #{lstm_tagger_forward.1} parent=1 // pred_check
      _
    $region3: #{lstm_tagger_forward.1} parent=1 // pred_check_branch
      %12 = sbr.rel (0) target = $region5
    $region4: #{lstm_tagger_forward.1} parent=1 // pred_region
      %s14 = ssub.s32 16, 16
      %15 = vsyncadd [#allocation3], %s14
      %s17 = sshll.u32 [#allocation2], 4
      %s18 = int_to_ptr.vmem [resolvable:$true] %s17
      %20 = dma.hbm_to_vmem [thread:$0]  %s0, 16, %s18, [#allocation3]
    $region5: #{lstm_tagger_forward.1} parent=1 // pred_fallthru
      _
    // Predicated region
    $region6: #{lstm_tagger_forward.1} parent=1 // pred_check
      _
    $region7: #{lstm_tagger_forward.1} parent=1 // pred_check_branch
      %22 = sbr.rel (0) target = $region9
    $region8: #{lstm_tagger_forward.1} parent=1 // pred_region
      %s24 = ssub.s32 1536, 1536
      %25 = vsyncadd [#allocation6], %s24
      %s26 = sshll.u32 [#allocation5], 4
      %s27 = int_to_ptr.vmem [resolvable:$true] %s26
      %32 = dma.hbm_to_vmem [thread:$0]  %s1, 1536, %s27, [#allocation6], 128, 128, 8
    $region9: #{lstm_tagger_forward.1} parent=1 // pred_fallthru
      _
    // Predicated region
    $region10: #{lstm_tagger_forward.1} parent=1 // pred_check
      _
    $region11: #{lstm_tagger_forward.1} parent=1 // pred_check_branch
      %34 = sbr.rel (0) target = $region13
    $region12: #{lstm_tagger_forward.1} parent=1 // pred_region
      %s36 = ssub.s32 64, 64
      %37 = vsyncadd [#allocation6], %s36
      %s39 = sshll.u32 [#allocation7], 4
      %s40 = int_to_ptr.vmem [resolvable:$true] %s39
      %42 = dma.hbm_to_vmem [thread:$0]  %s2, 64, %s40, [#allocation6]
    $region13: #{lstm_tagger_forward.1} parent=1 // pred_fallthru
      _
    // Predicated region
    $region14: #{lstm_tagger_forward.1} parent=1 // pred_check
      _
    $region15: #{lstm_tagger_forward.1} parent=1 // pred_check_branch
      %44 = sbr.rel (0) target = $region17
    $region16: #{lstm_tagger_forward.1} parent=1 // pred_region
      %45 = dma.done [#allocation3], 16
    $region17: #{lstm_tagger_forward.1} parent=1 // pred_fallthru
      _
    // Predicated region
    $region18: #{lstm_tagger_forward.1} parent=1 // pred_check
      _
    $region19: #{lstm_tagger_forward.1} parent=1 // pred_check_branch
      %47 = sbr.rel (0) target = $region21
    $region20: #{lstm_tagger_forward.1} parent=1 // pred_region
      %48 = dma.done [#allocation6], 1536
    $region21: #{lstm_tagger_forward.1} parent=1 // pred_fallthru
      _
    // Predicated region
    $region22: #{lstm_tagger_forward.1} parent=1 // pred_check
      _
    $region23: #{lstm_tagger_forward.1} parent=1 // pred_check_branch
      %50 = sbr.rel (0) target = $region25
    $region24: #{lstm_tagger_forward.1} parent=1 // pred_region
      %51 = dma.done [#allocation6], 64
    $region25: #{lstm_tagger_forward.1} parent=1 // pred_fallthru
      _
    %v52 = vld [vmem:[#allocation2] sm:$0x1]
    %v53 = vld [vmem:[#allocation5] sm:$0xff]
    %v54 = vld [vmem:[#allocation5 + $0x8] sm:$0xff]
    %v55 = vld [vmem:[#allocation5 + $0x10] sm:$0xff]
    %v56 = vld [vmem:[#allocation5 + $0x18] sm:$0xff]
    %v57 = vld [vmem:[#allocation7] sm:$0x1]
    %vm58 = vcmask 261120
    %v60 = vsel %vm58, %v52, 0
    %62 = vmatprep.subr.mxu0 0.0
    %63 = vmatpush1.msra.mxu0 0.0
    %64 = vmatprep.subr.mxu0 0.0
    %65 = vmatpush1.msra.mxu0 0.0
    %66 = vmatprep.subr.mxu0 0.0
    %67 = vmatpush1.msra.mxu0 0.0
    %68 = vmatprep.subr.mxu0 0.0
    %69 = vmatpush1.msra.mxu0 0.0
    %70 = vmatprep.subr.mxu0 0.0
    %71 = vmatpush1.msra.mxu0 0.0
    %72 = vmatprep.subr.mxu0 0.0
    %73 = vmatpush1.msra.mxu0 0.0
    %74 = vmatprep.subr.mxu0 0.0
    %75 = vmatpush1.msra.mxu0 0.0
    %76 = vmatprep.subr.mxu0 0.0
    %77 = vmatpush1.msra.mxu0 0.0
    %78 = vmatprep.subr.mxu0 0.0
    %79 = vmatpush1.msra.mxu0 0.0
    %80 = vmatprep.subr.mxu0 0.0
    %81 = vmatpush1.msra.mxu0 0.0
    %82 = vmatprep.subr.mxu0 0.0
    %83 = vmatpush1.msra.mxu0 0.0
    %84 = vmatprep.subr.mxu0 0.0
    %85 = vmatpush1.msra.mxu0 0.0
    %86 = vmatprep.subr.mxu0 0.0
    %87 = vmatpush1.msra.mxu0 %v56
    %88 = vmatprep.subr.mxu0 0.0
    %89 = vmatpush1.msra.mxu0 %v55
    %90 = vmatprep.subr.mxu0 0.0
    %91 = vmatpush1.msra.mxu0 %v54
    %92 = vmatprep.subr.mxu0 0.0
    %93 = vmatpush1.msra.mxu0 %v53
    %94 = vmatprep.subr.mxu0 0.0
    %95 = vmatpush2.msra.mxu0 0.0
    %96 = vmatprep.subr.mxu0 0.0
    %97 = vmatpush2.msra.mxu0 0.0
    %98 = vmatprep.subr.mxu0 0.0
    %99 = vmatpush2.msra.mxu0 0.0
    %100 = vmatprep.subr.mxu0 0.0
    %101 = vmatpush2.msra.mxu0 0.0
    %102 = vmatprep.subr.mxu0 0.0
    %103 = vmatpush2.msra.mxu0 0.0
    %104 = vmatprep.subr.mxu0 0.0
    %105 = vmatpush2.msra.mxu0 0.0
    %106 = vmatprep.subr.mxu0 0.0
    %107 = vmatpush2.msra.mxu0 0.0
    %108 = vmatprep.subr.mxu0 0.0
    %109 = vmatpush2.msra.mxu0 0.0
    %110 = vmatprep.subr.mxu0 0.0
    %111 = vmatpush2.msra.mxu0 0.0
    %112 = vmatprep.subr.mxu0 0.0
    %113 = vmatpush2.msra.mxu0 0.0
    %114 = vmatprep.subr.mxu0 0.0
    %115 = vmatpush2.msra.mxu0 0.0
    %116 = vmatprep.subr.mxu0 0.0
    %117 = vmatpush2.msra.mxu0 0.0
    %118 = vmatprep.subr.mxu0 0.0
    %119 = vmatpush2.msra.mxu0 0.0
    %120 = vmatprep.subr.mxu0 0.0
    %121 = vmatpush2.msra.mxu0 0.0
    %122 = vmatprep.subr.mxu0 0.0
    %123 = vmatpush2.msra.mxu0 0.0
    %124 = vmatprep.subr.mxu0 0.0
    %125 = vmatpush2.msra.mxu0 0.0
    %126 = vmatprep.mubr.f32.mxu0 0.0
    %127 = vmatmul.mubr.f32.gmra.mxu0 %v60
    %v128 = vpop.f32.mrf.mxu0
    %v129 = vadd.f32 %v57, %v128
    %v130 = vpop.f32.mrf.mxu0
    %131 = vdwg.mxu0
    %v132 = vtanh.pop %v129
    %v133 = vadd.f32 %v132, 1.0
    %v134 = vmul.f32 %v133, 0.5
    %136 = vrot.lane.b32.xlu0 %v132, 64
    %v137 = vpop.permute.xlu0 %136
    %v139 = vmul.f32 %v134, %v137
    %v140 = vtanh.pop %v139
    %142 = vrot.lane.b32.xlu0 %v140, 96
    %v143 = vpop.permute.xlu0 %142
    %v145 = vmul.f32 %v134, %v143
    %s146 = scalar_lea.vmem [#allocation5], 32
    %v147 = vld [vmem:[%s146] sm:$0xff]
    %v148 = vld [vmem:[%s146 + $0x8] sm:$0xff]
    %v149 = vld [vmem:[%s146 + $0x10] sm:$0xff]
    %v150 = vld [vmem:[%s146 + $0x18] sm:$0xff]
    %v151 = vld [vmem:[#allocation7 + $0x1] sm:$0x1]
    %153 = vrot.lane.b32.xlu0 %v145, 32
    %v154 = vpop.permute.xlu0 %153
    %v155 = vsel %vm58, %v154, 0
    %157 = vmatprep.subr.mxu0 0.0
    %158 = vmatpush1.msra.mxu0 0.0
    %159 = vmatprep.subr.mxu0 0.0
    %160 = vmatpush1.msra.mxu0 0.0
    %161 = vmatprep.subr.mxu0 0.0
    %162 = vmatpush1.msra.mxu0 0.0
    %163 = vmatprep.subr.mxu0 0.0
    %164 = vmatpush1.msra.mxu0 0.0
    %165 = vmatprep.subr.mxu0 0.0
    %166 = vmatpush1.msra.mxu0 0.0
    %167 = vmatprep.subr.mxu0 0.0
    %168 = vmatpush1.msra.mxu0 0.0
    %169 = vmatprep.subr.mxu0 0.0
    %170 = vmatpush1.msra.mxu0 0.0
    %171 = vmatprep.subr.mxu0 0.0
    %172 = vmatpush1.msra.mxu0 0.0
    %173 = vmatprep.subr.mxu0 0.0
    %174 = vmatpush1.msra.mxu0 0.0
    %175 = vmatprep.subr.mxu0 0.0
    %176 = vmatpush1.msra.mxu0 0.0
    %177 = vmatprep.subr.mxu0 0.0
    %178 = vmatpush1.msra.mxu0 0.0
    %179 = vmatprep.subr.mxu0 0.0
    %180 = vmatpush1.msra.mxu0 0.0
    %181 = vmatprep.subr.mxu0 0.0
    %182 = vmatpush1.msra.mxu0 %v150
    %183 = vmatprep.subr.mxu0 0.0
    %184 = vmatpush1.msra.mxu0 %v149
    %185 = vmatprep.subr.mxu0 0.0
    %186 = vmatpush1.msra.mxu0 %v148
    %187 = vmatprep.subr.mxu0 0.0
    %188 = vmatpush1.msra.mxu0 %v147
    %189 = vmatprep.subr.mxu0 0.0
    %190 = vmatpush2.msra.mxu0 0.0
    %191 = vmatprep.subr.mxu0 0.0
    %192 = vmatpush2.msra.mxu0 0.0
    %193 = vmatprep.subr.mxu0 0.0
    %194 = vmatpush2.msra.mxu0 0.0
    %195 = vmatprep.subr.mxu0 0.0
    %196 = vmatpush2.msra.mxu0 0.0
    %197 = vmatprep.subr.mxu0 0.0
    %198 = vmatpush2.msra.mxu0 0.0
    %199 = vmatprep.subr.mxu0 0.0
    %200 = vmatpush2.msra.mxu0 0.0
    %201 = vmatprep.subr.mxu0 0.0
    %202 = vmatpush2.msra.mxu0 0.0
    %203 = vmatprep.subr.mxu0 0.0
    %204 = vmatpush2.msra.mxu0 0.0
    %205 = vmatprep.subr.mxu0 0.0
    %206 = vmatpush2.msra.mxu0 0.0
    %207 = vmatprep.subr.mxu0 0.0
    %208 = vmatpush2.msra.mxu0 0.0
    %209 = vmatprep.subr.mxu0 0.0
    %210 = vmatpush2.msra.mxu0 0.0
    %211 = vmatprep.subr.mxu0 0.0
    %212 = vmatpush2.msra.mxu0 0.0
    %213 = vmatprep.subr.mxu0 0.0
    %214 = vmatpush2.msra.mxu0 0.0
    %215 = vmatprep.subr.mxu0 0.0
    %216 = vmatpush2.msra.mxu0 0.0
    %217 = vmatprep.subr.mxu0 0.0
    %218 = vmatpush2.msra.mxu0 0.0
    %219 = vmatprep.subr.mxu0 0.0
    %220 = vmatpush2.msra.mxu0 0.0
    %221 = vmatprep.mubr.f32.mxu0 0.0
    %222 = vmatmul.mubr.f32.gmra.mxu0 %v155
    %v223 = vpop.f32.mrf.mxu0
    %v224 = vadd.f32 %v151, %v223
    %v225 = vpop.f32.mrf.mxu0
    %226 = vdwg.mxu0
    %v227 = vtanh.pop %v224
    %v228 = vadd.f32 %v227, 1.0
    %v229 = vmul.f32 %v228, 0.5
    %231 = vrot.lane.b32.xlu0 %v227, 64
    %v232 = vpop.permute.xlu0 %231
    %v234 = vmul.f32 %v229, %v232
    %v235 = vtanh.pop %v234
    %237 = vrot.lane.b32.xlu0 %v235, 96
    %v238 = vpop.permute.xlu0 %237
    %v240 = vmul.f32 %v229, %v238
    %s241 = scalar_lea.vmem [#allocation5], 64
    %v242 = vld [vmem:[%s241] sm:$0xff]
    %v243 = vld [vmem:[%s241 + $0x8] sm:$0xff]
    %v244 = vld [vmem:[%s241 + $0x10] sm:$0xff]
    %v245 = vld [vmem:[%s241 + $0x18] sm:$0xff]
    %v246 = vld [vmem:[#allocation7 + $0x2] sm:$0x1]
    %248 = vrot.lane.b32.xlu0 %v240, 32
    %v249 = vpop.permute.xlu0 %248
    %v250 = vsel %vm58, %v249, 0
    %252 = vmatprep.subr.mxu0 0.0
    %253 = vmatpush1.msra.mxu0 0.0
    %254 = vmatprep.subr.mxu0 0.0
    %255 = vmatpush1.msra.mxu0 0.0
    %256 = vmatprep.subr.mxu0 0.0
    %257 = vmatpush1.msra.mxu0 0.0
    %258 = vmatprep.subr.mxu0 0.0
    %259 = vmatpush1.msra.mxu0 0.0
    %260 = vmatprep.subr.mxu0 0.0
    %261 = vmatpush1.msra.mxu0 0.0
    %262 = vmatprep.subr.mxu0 0.0
    %263 = vmatpush1.msra.mxu0 0.0
    %264 = vmatprep.subr.mxu0 0.0
    %265 = vmatpush1.msra.mxu0 0.0
    %266 = vmatprep.subr.mxu0 0.0
    %267 = vmatpush1.msra.mxu0 0.0
    %268 = vmatprep.subr.mxu0 0.0
    %269 = vmatpush1.msra.mxu0 0.0
    %270 = vmatprep.subr.mxu0 0.0
    %271 = vmatpush1.msra.mxu0 0.0
    %272 = vmatprep.subr.mxu0 0.0
    %273 = vmatpush1.msra.mxu0 0.0
    %274 = vmatprep.subr.mxu0 0.0
    %275 = vmatpush1.msra.mxu0 0.0
    %276 = vmatprep.subr.mxu0 0.0
    %277 = vmatpush1.msra.mxu0 %v245
    %278 = vmatprep.subr.mxu0 0.0
    %279 = vmatpush1.msra.mxu0 %v244
    %280 = vmatprep.subr.mxu0 0.0
    %281 = vmatpush1.msra.mxu0 %v243
    %282 = vmatprep.subr.mxu0 0.0
    %283 = vmatpush1.msra.mxu0 %v242
    %284 = vmatprep.subr.mxu0 0.0
    %285 = vmatpush2.msra.mxu0 0.0
    %286 = vmatprep.subr.mxu0 0.0
    %287 = vmatpush2.msra.mxu0 0.0
    %288 = vmatprep.subr.mxu0 0.0
    %289 = vmatpush2.msra.mxu0 0.0
    %290 = vmatprep.subr.mxu0 0.0
    %291 = vmatpush2.msra.mxu0 0.0
    %292 = vmatprep.subr.mxu0 0.0
    %293 = vmatpush2.msra.mxu0 0.0
    %294 = vmatprep.subr.mxu0 0.0
    %295 = vmatpush2.msra.mxu0 0.0
    %296 = vmatprep.subr.mxu0 0.0
    %297 = vmatpush2.msra.mxu0 0.0
    %298 = vmatprep.subr.mxu0 0.0
    %299 = vmatpush2.msra.mxu0 0.0
    %300 = vmatprep.subr.mxu0 0.0
    %301 = vmatpush2.msra.mxu0 0.0
    %302 = vmatprep.subr.mxu0 0.0
    %303 = vmatpush2.msra.mxu0 0.0
    %304 = vmatprep.subr.mxu0 0.0
    %305 = vmatpush2.msra.mxu0 0.0
    %306 = vmatprep.subr.mxu0 0.0
    %307 = vmatpush2.msra.mxu0 0.0
    %308 = vmatprep.subr.mxu0 0.0
    %309 = vmatpush2.msra.mxu0 0.0
    %310 = vmatprep.subr.mxu0 0.0
    %311 = vmatpush2.msra.mxu0 0.0
    %312 = vmatprep.subr.mxu0 0.0
    %313 = vmatpush2.msra.mxu0 0.0
    %314 = vmatprep.subr.mxu0 0.0
    %315 = vmatpush2.msra.mxu0 0.0
    %316 = vmatprep.mubr.f32.mxu0 0.0
    %317 = vmatmul.mubr.f32.gmra.mxu0 %v250
    %v318 = vpop.f32.mrf.mxu0
    %v319 = vadd.f32 %v246, %v318
    %v320 = vpop.f32.mrf.mxu0
    %321 = vdwg.mxu0
    %vm322 = vcmask 57344
    %v323 = vsel %vm322, %v319, -inf
    %324 = vmax.xlane.f32.xlu0 %v323
    %v325 = vpop.xlane.xlu0 %324
    %v326 = vsub.f32 %v319, %v325
    %v327 = vmul.f32 %v326, 1.442695
    %v328 = vpow.pop %v327
    %v329 = vsel %vm322, %v328, 0.0
    %330 = vadd.xlane.f32.xlu0 %v329
    %v331 = vpop.xlane.xlu0 %330
    %v332 = vlog2.pop %v331
    %v333 = vmul.f32 %v332, 0.6931472
    %v334 = vadd.f32 %v333, %v325
    %v335 = vsub.f32 %v319, %v334
    %336 = vst [vmem:[#allocation8] sm:$0x1] %v335
    // Predicated region
    $region26: #{lstm_tagger_forward.1} parent=1 // pred_check
      _
    $region27: #{lstm_tagger_forward.1} parent=1 // pred_check_branch
      %338 = sbr.rel (0) target = $region29
    $region28: #{lstm_tagger_forward.1} parent=1 // pred_region
      %s340 = ssub.s32 16, 16
      %341 = vsyncadd [#allocation4], %s340
      %s343 = sshll.u32 [#allocation8], 4
      %s344 = int_to_ptr.vmem [resolvable:$true] %s343
      %346 = dma.vmem_to_hbm [thread:$0]  %s344, 16, %s3, [#allocation4]
    $region29: #{lstm_tagger_forward.1} parent=1 // pred_fallthru
      _
    // Predicated region
    $region30: #{lstm_tagger_forward.1} parent=1 // pred_check
      _
    $region31: #{lstm_tagger_forward.1} parent=1 // pred_check_branch
      %348 = sbr.rel (0) target = $region33
    $region32: #{lstm_tagger_forward.1} parent=1 // pred_region
      %349 = dma.done [#allocation4], 16
    $region33: #{lstm_tagger_forward.1} parent=1 // pred_fallthru
      _
    %350 = vsyncpa [#allocation3], 1
    %351 = vsyncpa [#allocation6], 1
    %352 = vsyncpa [#allocation4], 1

</llo_original>
